<compile_context>
chip_gen: v7x
topology: tpu7x:2x2x1
jax: 0.10.0
libtpu: 0.0.40
codegen_flags: <defaults>
</compile_context>

<pallas_src>
import functools

import jax
import jax.numpy as jnp
from jax import lax
from jax.experimental import pallas as pl
from jax.experimental.pallas import tpu as pltpu

_LANE = 128
_VMEM_LIMIT = 48 * 1024 * 1024          # < v7x 64 MiB physical, fine on v5e/v6e
_FUSED_BYTES_LIMIT = 24 * 1024 * 1024   # gate for the single-kernel path


def _round_up(v, m):
    return ((v + m - 1) // m) * m


def _choose_tiles(n):
    """Minimal node-dim padding, then largest row tile with >=2 grid steps."""
    np_ = _round_up(n, _LANE)
    tile_m = _LANE
    for t in (512, 256):
        if np_ % t == 0 and np_ // t >= 2:
            tile_m = t
            break
    tile_k = tile_m
    while tile_k * 2 <= min(np_, 1024) and np_ % (tile_k * 2) == 0:
        tile_k *= 2
    return np_, tile_m, tile_k


# ---------------------------------------------------------------------------
# Kernels
# ---------------------------------------------------------------------------
def _fused_forward_kernel(x_ref, adj_ref, w1_ref, w23_ref,
                          adjrec_ref, muvar_ref, *, h2_dim, cd):
    """Whole forward in VMEM (small graphs). adj may arrive bf16."""
    adj = adj_ref[...].astype(cd)
    s1 = jnp.dot(x_ref[...], w1_ref[...],
                 preferred_element_type=jnp.float32).astype(cd)
    h1 = jnp.maximum(
        jnp.dot(adj, s1, preferred_element_type=jnp.float32), 0.0).astype(cd)
    s23 = jnp.dot(h1, w23_ref[...],
                  preferred_element_type=jnp.float32).astype(cd)
    muvar = jnp.dot(adj, s23, preferred_element_type=jnp.float32)
    muvar_ref[...] = muvar
    # z = mu (eval mode); mask away logvar + padding columns before the
    # inner-product decoder so they cannot contaminate adj_rec.
    col = lax.broadcasted_iota(jnp.int32, muvar.shape, 1)
    z = jnp.where(col < h2_dim, muvar, 0.0).astype(cd)
    adjrec_ref[...] = lax.dot_general(
        z, z, dimension_numbers=(((1,), (1,)), ((), ())),
        preferred_element_type=jnp.float32).astype(adjrec_ref.dtype)


def _dense_matmul_kernel(x_ref, w_ref, out_ref):
    # out[i] = x[i] @ W   (W fully VMEM-resident, x rows tiled over the grid)
    out_ref[...] = jnp.dot(
        x_ref[...], w_ref[...],
        preferred_element_type=jnp.float32).astype(out_ref.dtype)


def _adj_matmul_kernel(adj_ref, s_ref, *refs, tile_k, apply_relu,
                       emit_z, h2_dim):
    # out[i] = act(sum_k adj[i, k-block] @ s[k-block]) with f32 VMEM acc.
    # s is fully VMEM-resident (constant block index); slice the k-block here.
    out_ref = refs[0]
    z_ref = refs[1] if emit_z else None
    acc_ref = refs[-1]
    k = pl.program_id(1)

    @pl.when(k == 0)
    def _():
        acc_ref[...] = jnp.zeros_like(acc_ref)

    kk = pl.multiple_of(k * tile_k, tile_k)
    a = adj_ref[...].astype(s_ref.dtype)          # cast (possibly f32) to bf16
    acc_ref[...] += jnp.dot(a, s_ref[pl.ds(kk, tile_k), :],
                            preferred_element_type=jnp.float32)

    @pl.when(k == pl.num_programs(1) - 1)
    def _():
        r = acc_ref[...]
        if apply_relu:
            r = jnp.maximum(r, 0.0)
        out_ref[...] = r.astype(out_ref.dtype)
        if emit_z:
            zc = z_ref.shape[1]
            col = lax.broadcasted_iota(jnp.int32, (r.shape[0], zc), 1)
            z_ref[...] = jnp.where(col < h2_dim, r[:, :zc], 0.0
                                   ).astype(z_ref.dtype)


def _inner_product_kernel(z_ref, out_ref, *, tile_m, tile_n):
    # adj_rec[i, j] = z[i] @ z[j]^T with z fully VMEM-resident (read once);
    # contract dim 1 of both operands -> no materialized transpose.
    i = pl.program_id(0)
    j = pl.program_id(1)
    zi = z_ref[pl.ds(pl.multiple_of(i * tile_m, tile_m), tile_m), :]
    zj = z_ref[pl.ds(pl.multiple_of(j * tile_n, tile_n), tile_n), :]
    out_ref[...] = lax.dot_general(
        zi, zj, dimension_numbers=(((1,), (1,)), ((), ())),
        preferred_element_type=jnp.float32).astype(out_ref.dtype)


# ---------------------------------------------------------------------------
# pallas_call wrappers (staged path)
# ---------------------------------------------------------------------------
def _dense_matmul(x, w, tile, out_dtype):
    m, kdim = x.shape
    _, nout = w.shape
    bytes_accessed = (m * kdim * x.dtype.itemsize
                      + kdim * nout * w.dtype.itemsize
                      + m * nout * jnp.dtype(out_dtype).itemsize)
    return pl.pallas_call(
        _dense_matmul_kernel,
        out_shape=jax.ShapeDtypeStruct((m, nout), out_dtype),
        grid_spec=pltpu.PrefetchScalarGridSpec(
            num_scalar_prefetch=0,
            grid=(m // tile,),
            in_specs=[
                pl.BlockSpec((tile, kdim), lambda i: (i, 0)),
                pl.BlockSpec((kdim, nout), lambda i: (0, 0)),
            ],
            out_specs=pl.BlockSpec((tile, nout), lambda i: (i, 0)),
        ),
        compiler_params=pltpu.CompilerParams(
            dimension_semantics=("parallel",),
            vmem_limit_bytes=_VMEM_LIMIT),
        cost_estimate=pl.CostEstimate(
            flops=2 * m * kdim * nout, transcendentals=0,
            bytes_accessed=bytes_accessed),
    )(x, w)


def _adj_matmul(adj, s, *, tile_m, tile_k, apply_relu, out_dtype,
                z_out=None, h2_dim=None):
    m, kdim = adj.shape
    _, c = s.shape
    emit_z = z_out is not None
    kernel = functools.partial(
        _adj_matmul_kernel, tile_k=tile_k, apply_relu=apply_relu,
        emit_z=emit_z, h2_dim=(h2_dim if h2_dim is not None else 0))

    out_shapes = [jax.ShapeDtypeStruct((m, c), out_dtype)]
    out_specs = [pl.BlockSpec((tile_m, c), lambda i, k: (i, 0))]
    if emit_z:
        out_shapes.append(jax.ShapeDtypeStruct((m, z_out), jnp.bfloat16))
        out_specs.append(pl.BlockSpec((tile_m, z_out), lambda i, k: (i, 0)))

    bytes_accessed = (m * kdim * adj.dtype.itemsize
                      + kdim * c * s.dtype.itemsize
                      + m * c * jnp.dtype(out_dtype).itemsize)
    return pl.pallas_call(
        kernel,
        out_shape=tuple(out_shapes) if emit_z else out_shapes[0],
        grid_spec=pltpu.PrefetchScalarGridSpec(
            num_scalar_prefetch=0,
            grid=(m // tile_m, kdim // tile_k),
            in_specs=[
                pl.BlockSpec((tile_m, tile_k), lambda i, k: (i, k)),
                # s fully VMEM-resident: constant block index -> single DMA.
                pl.BlockSpec((kdim, c), lambda i, k: (0, 0)),
            ],
            out_specs=tuple(out_specs) if emit_z else out_specs[0],
            scratch_shapes=[pltpu.VMEM((tile_m, c), jnp.float32)],
        ),
        compiler_params=pltpu.CompilerParams(
            dimension_semantics=("parallel", "arbitrary"),
            vmem_limit_bytes=_VMEM_LIMIT),
        cost_estimate=pl.CostEstimate(
            flops=2 * m * kdim * c, transcendentals=0,
            bytes_accessed=bytes_accessed),
    )(adj, s)


def _inner_product(z, *, tile_m, tile_n, out_dtype=jnp.float32):
    # NOTE: out_dtype could be bf16 on v5e if downstream tolerates it (the
    # decoder is store-bound there); kept f32 for parity with the f32 module.
    m, h2p = z.shape
    kernel = functools.partial(_inner_product_kernel,
                               tile_m=tile_m, tile_n=tile_n)
    bytes_accessed = (m * h2p * z.dtype.itemsize
                      + m * m * jnp.dtype(out_dtype).itemsize)
    return pl.pallas_call(
        kernel,
        out_shape=jax.ShapeDtypeStruct((m, m), out_dtype),
        grid_spec=pltpu.PrefetchScalarGridSpec(
            num_scalar_prefetch=0,
            grid=(m // tile_m, m // tile_n),
            in_specs=[pl.BlockSpec((m, h2p), lambda i, j: (0, 0))],  # resident
            out_specs=pl.BlockSpec((tile_m, tile_n), lambda i, j: (i, j)),
        ),
        compiler_params=pltpu.CompilerParams(
            dimension_semantics=("parallel", "parallel"),
            vmem_limit_bytes=_VMEM_LIMIT),
        cost_estimate=pl.CostEstimate(
            flops=2 * m * m * h2p, transcendentals=0,
            bytes_accessed=bytes_accessed),
    )(z)


# ---------------------------------------------------------------------------
# Forward
# ---------------------------------------------------------------------------
def gcn_model_vae_forward(x, adj, w1, w2, w3, *, compute_dtype=jnp.bfloat16):
    """GCNModelVAE forward (eval mode) via Pallas TPU kernels.

    x: [N, F_in] f32; adj: [N, N] f32 (row-normalized dense adjacency);
    w1: [F_in, H1]; w2/w3: [H1, H2].
    Returns (adj_rec [N, N] f32, mu [N, H2] f32, logvar [N, H2] f32).
    """
    n, f_in = x.shape
    h1_dim = w1.shape[1]
    h2_dim = w2.shape[1]
    cd = jnp.dtype(compute_dtype)

    fp = _round_up(f_in, _LANE)
    h1p = _round_up(h1_dim, _LANE)
    h2p = _round_up(h2_dim, _LANE)

    # Packed [mu | logvar] layout: when both halves fit in one 128-lane block
    # keep them contiguous so s23 / muvar / the 2nd adj GEMM stay 128 wide.
    if 2 * h2_dim <= _LANE:
        c23 = _LANE
        lv_off = h2_dim
    else:
        c23 = 2 * h2p
        lv_off = h2p

    def _pack_weights(np_pad):
        x_p = jnp.zeros((np_pad, fp), cd).at[:n, :f_in].set(x.astype(cd))
        w1_p = jnp.zeros((fp, h1p), cd).at[:f_in, :h1_dim].set(w1.astype(cd))
        w23_p = jnp.zeros((h1p, c23), cd)
        w23_p = w23_p.at[:h1_dim, :h2_dim].set(w2.astype(cd))
        w23_p = w23_p.at[:h1_dim, lv_off:lv_off + h2_dim].set(w3.astype(cd))
        return x_p, w1_p, w23_p

    # ---- fused single-kernel path for small graphs -------------------------
    np_f = _round_up(n, _LANE)
    fused_bytes = (np_f * fp * 2 + np_f * np_f * 2            # x, adj (bf16)
                   + fp * h1p * 2 + h1p * c23 * 2             # weights
                   + np_f * np_f * 4 + np_f * c23 * 4         # adj_rec, muvar
                   + np_f * (h1p + c23) * 12)                 # temporaries
    if fused_bytes <= _FUSED_BYTES_LIMIT:
        x_p, w1_p, w23_p = _pack_weights(np_f)
        adj_p = jnp.zeros((np_f, np_f), cd).at[:n, :n].set(adj.astype(cd))
        kernel = functools.partial(_fused_forward_kernel,
                                   h2_dim=h2_dim, cd=cd)
        adj_rec, muvar = pl.pallas_call(
            kernel,
            out_shape=(jax.ShapeDtypeStruct((np_f, np_f), jnp.float32),
                       jax.ShapeDtypeStruct((np_f, c23), jnp.float32)),
            in_specs=[pl.BlockSpec(memory_space=pltpu.MemorySpace.VMEM)] * 4,
            out_specs=(pl.BlockSpec(memory_space=pltpu.MemorySpace.VMEM),
                       pl.BlockSpec(memory_space=pltpu.MemorySpace.VMEM)),
            compiler_params=pltpu.CompilerParams(
                vmem_limit_bytes=_VMEM_LIMIT),
        )(x_p, adj_p, w1_p, w23_p)
        mu = muvar[:n, :h2_dim]
        logvar = muvar[:n, lv_off:lv_off + h2_dim]
        return adj_rec[:n, :n], mu, logvar

    # ---- staged, tiled path for larger graphs ------------------------------
    np_, tile_m, tile_k = _choose_tiles(n)
    x_p, w1_p, w23_p = _pack_weights(np_)

    if n == np_:
        # Node dim already tile-aligned: skip the full pad/cast pass over the
        # largest tensor; kernels cast adj blocks to bf16 inside VMEM.
        adj_p = adj
    else:
        adj_p = jnp.zeros((np_, np_), cd).at[:n, :n].set(adj.astype(cd))

    # gc1: h1 = relu(adj @ (x @ W1))
    s1 = _dense_matmul(x_p, w1_p, tile_m, out_dtype=cd)
    h1 = _adj_matmul(adj_p, s1, tile_m=tile_m, tile_k=tile_k,
                     apply_relu=True, out_dtype=cd)

    # gc2 + gc3 fused: [mu|logvar] = adj @ (h1 @ [W2|W3]); same pass also
    # emits a masked bf16 z (= mu) slab for the decoder.
    s23 = _dense_matmul(h1, w23_p, tile_m, out_dtype=cd)
    muvar, z = _adj_matmul(adj_p, s23, tile_m=tile_m, tile_k=tile_k,
                           apply_relu=False, out_dtype=jnp.float32,
                           z_out=h2p, h2_dim=h2_dim)

    # decoder: adj_rec = z @ z.T (identity activation), z VMEM-resident.
    adj_rec = _inner_product(z, tile_m=tile_m, tile_n=tile_m)

    mu = muvar[:n, :h2_dim]
    logvar = muvar[:n, lv_off:lv_off + h2_dim]
    return adj_rec[:n, :n], mu, logvar


# ---------------------------------------------------------------------------
# Reference + test
# ---------------------------------------------------------------------------
def _glorot(key, shape):
    fan_in, fan_out = shape
    limit = jnp.sqrt(6.0 / (fan_in + fan_out))
    return jax.random.uniform(key, shape, jnp.float32, -limit, limit)


def _reference(x, adj, w1, w2, w3, compute_dtype=jnp.bfloat16):
    # Mirrors the kernel's precision: bf16 operands, f32 MXU accumulation.
    cd = compute_dtype
    xc, ac = x.astype(cd), adj.astype(cd)
    dot = lambda a, b: jnp.dot(a, b, preferred_element_type=jnp.float32)
    s1 = dot(xc, w1.astype(cd)).astype(cd)
    h1 = jnp.maximum(dot(ac, s1), 0.0).astype(cd)
    mu = dot(ac, dot(h1, w2.astype(cd)).astype(cd))
    logvar = dot(ac, dot(h1, w3.astype(cd)).astype(cd))
    z = mu.astype(cd)
    adj_rec = lax.dot_general(
        z, z, dimension_numbers=(((1,), (1,)), ((), ())),
        preferred_element_type=jnp.float32)
    return adj_rec, mu, logvar


def _make_inputs(key, n, f_in, h1, h2):
    kx, kadj, k1, k2, k3 = jax.random.split(key, 5)
    x = jax.random.normal(kx, (n, f_in), jnp.float32)
    a = (jax.random.uniform(kadj, (n, n)) > 0.9).astype(jnp.float32)
    a = jnp.maximum(a, a.T) + jnp.eye(n, dtype=jnp.float32)
    adj = a / jnp.sum(a, axis=1, keepdims=True)
    w1 = _glorot(k1, (f_in, h1))
    w2 = _glorot(k2, (h1, h2))
    w3 = _glorot(k3, (h1, h2))
    return x, adj, w1, w2, w3


def _check(n, h2, out, ref):
    adj_rec, mu, logvar = out
    assert adj_rec.shape == (n, n)
    assert mu.shape == (n, h2) and logvar.shape == (n, h2)
    assert jnp.allclose(mu, ref[1], atol=2e-3, rtol=2e-3)
    assert jnp.allclose(logvar, ref[2], atol=2e-3, rtol=2e-3)
    assert jnp.allclose(adj_rec, ref[0], atol=1e-2, rtol=1e-2)


if __name__ == "__main__":
    key = jax.random.PRNGKey(0)
    k_small, k_big = jax.random.split(key)

    # Small graph -> fully fused single-kernel path.
    N, F_IN, H1, H2 = 16, 32, 32, 16
    x, adj, w1, w2, w3 = _make_inputs(k_small, N, F_IN, H1, H2)
    out = gcn_model_vae_forward(x, adj, w1, w2, w3)
    jax.block_until_ready(out)
    _check(N, H2, out, _reference(x, adj, w1, w2, w3))

    # Larger graph -> staged tiled path (row-tiled adj GEMMs + decoder).
    N2, F2 = 2000, 48
    x, adj, w1, w2, w3 = _make_inputs(k_big, N2, F2, H1, H2)
    out = gcn_model_vae_forward(x, adj, w1, w2, w3)
    jax.block_until_ready(out)
    _check(N2, H2, out, _reference(x, adj, w1, w2, w3))

    print("KERNEL_OK")
</pallas_src>

<mosaic_0001>
module attributes {stable_mosaic.version = 11 : i64} {
  func.func @_fused_forward_kernel(%arg0: memref<128x128xbf16, #tpu.memory_space<vmem>>, %arg1: memref<128x128xbf16, #tpu.memory_space<vmem>>, %arg2: memref<128x128xbf16, #tpu.memory_space<vmem>>, %arg3: memref<128x128xbf16, #tpu.memory_space<vmem>>, %arg4: memref<128x128xf32, #tpu.memory_space<vmem>>, %arg5: memref<128x128xf32, #tpu.memory_space<vmem>>) attributes {dimension_semantics = [], scalar_prefetch = 0 : i64, scratch_operands = 0 : i64, tpu.core_type = #tpu.core_type<tc>} {
    %c0 = arith.constant 0 : index
    %c0_0 = arith.constant 0 : index
    %0 = vector.load %arg1[%c0, %c0_0] : memref<128x128xbf16, #tpu.memory_space<vmem>>, vector<128x128xbf16>
    %c0_1 = arith.constant 0 : index
    %c0_2 = arith.constant 0 : index
    %1 = vector.load %arg0[%c0_1, %c0_2] : memref<128x128xbf16, #tpu.memory_space<vmem>>, vector<128x128xbf16>
    %c0_3 = arith.constant 0 : index
    %c0_4 = arith.constant 0 : index
    %2 = vector.load %arg2[%c0_3, %c0_4] : memref<128x128xbf16, #tpu.memory_space<vmem>>, vector<128x128xbf16>
    %cst = arith.constant dense<0.000000e+00> : vector<128x128xf32>
    %3 = tpu.matmul %1, %2, %cst {dimension_numbers = #tpu.dot_dimension_numbers<[1], [0], [0], [1], [0, 0, 1, 1], [], []>} : vector<128x128xbf16>, vector<128x128xbf16>, vector<128x128xf32> -> vector<128x128xf32>
    %4 = arith.truncf %3 : vector<128x128xf32> to vector<128x128xbf16>
    %cst_5 = arith.constant dense<0.000000e+00> : vector<128x128xf32>
    %5 = tpu.matmul %0, %4, %cst_5 {dimension_numbers = #tpu.dot_dimension_numbers<[1], [0], [0], [1], [0, 0, 1, 1], [], []>} : vector<128x128xbf16>, vector<128x128xbf16>, vector<128x128xf32> -> vector<128x128xf32>
    %cst_6 = arith.constant 0.000000e+00 : f32
    %6 = vector.broadcast %cst_6 : f32 to vector<128x128xf32>
    %7 = arith.maximumf %5, %6 : vector<128x128xf32>
    %8 = arith.truncf %7 : vector<128x128xf32> to vector<128x128xbf16>
    %c0_7 = arith.constant 0 : index
    %c0_8 = arith.constant 0 : index
    %9 = vector.load %arg3[%c0_7, %c0_8] : memref<128x128xbf16, #tpu.memory_space<vmem>>, vector<128x128xbf16>
    %cst_9 = arith.constant dense<0.000000e+00> : vector<128x128xf32>
    %10 = tpu.matmul %8, %9, %cst_9 {dimension_numbers = #tpu.dot_dimension_numbers<[1], [0], [0], [1], [0, 0, 1, 1], [], []>} : vector<128x128xbf16>, vector<128x128xbf16>, vector<128x128xf32> -> vector<128x128xf32>
    %11 = arith.truncf %10 : vector<128x128xf32> to vector<128x128xbf16>
    %cst_10 = arith.constant dense<0.000000e+00> : vector<128x128xf32>
    %12 = tpu.matmul %0, %11, %cst_10 {dimension_numbers = #tpu.dot_dimension_numbers<[1], [0], [0], [1], [0, 0, 1, 1], [], []>} : vector<128x128xbf16>, vector<128x128xbf16>, vector<128x128xf32> -> vector<128x128xf32>
    %c0_11 = arith.constant 0 : index
    %c0_12 = arith.constant 0 : index
    %13 = vector.load %arg5[%c0_11, %c0_12] : memref<128x128xf32, #tpu.memory_space<vmem>>, vector<128x128xf32>
    tpu.vector_store %arg5[%c0_11, %c0_12], %12 {strides = array<i32>} : memref<128x128xf32, #tpu.memory_space<vmem>>, vector<128x128xf32>,
    %14 = tpu.iota {dimensions = array<i32: 1>} : vector<128x128xi32>
    %c16_i32 = arith.constant 16 : i32
    %15 = vector.broadcast %c16_i32 : i32 to vector<128x128xi32>
    %16 = arith.cmpi slt, %14, %15 : vector<128x128xi32>
    %cst_13 = arith.constant 0.000000e+00 : f32
    %17 = vector.broadcast %cst_13 : f32 to vector<128x128xf32>
    %18 = arith.select %16, %12, %17 : vector<128x128xi1>, vector<128x128xf32>
    %19 = arith.truncf %18 : vector<128x128xf32> to vector<128x128xbf16>
    %cst_14 = arith.constant dense<0.000000e+00> : vector<128x128xf32>
    %20 = tpu.matmul %19, %19, %cst_14 {dimension_numbers = #tpu.dot_dimension_numbers<[1], [1], [0], [0], [0, 0, 1, 0], [], []>} : vector<128x128xbf16>, vector<128x128xbf16>, vector<128x128xf32> -> vector<128x128xf32>
    %c0_15 = arith.constant 0 : index
    %c0_16 = arith.constant 0 : index
    %21 = vector.load %arg4[%c0_15, %c0_16] : memref<128x128xf32, #tpu.memory_space<vmem>>, vector<128x128xf32>
    tpu.vector_store %arg4[%c0_15, %c0_16], %20 {strides = array<i32>} : memref<128x128xf32, #tpu.memory_space<vmem>>, vector<128x128xf32>,
    return
  }
}

</mosaic_0001>

<llo_original>
// kernel: tpu_custom_call.1
$region0: #{tpu_custom_call.1}
  #allocation0 [shape = 'u32[]', space=smem, size = 0x4, offset = 0x4, fixed_abs, tag = 'smem constant byte address 0x4 - core index']
  #allocation1 [shape = 'u32[144,128]{1,0:T(1,128)}', space=vmem, size = 0x12000, scoped, tag = 'internal scratch']
  %s0 = inlined_call_operand.hbm [shape: bf16[128,128], index: 0, kind: input, shape index: {}]
  %s1 = inlined_call_operand.hbm [shape: bf16[128,128], index: 1, kind: input, shape index: {}]
  %s2 = inlined_call_operand.hbm [shape: bf16[128,128], index: 2, kind: input, shape index: {}]
  %s3 = inlined_call_operand.hbm [shape: bf16[128,128], index: 3, kind: input, shape index: {}]
  %s4 = inlined_call_operand.hbm [shape: f32[128,128], index: 4, kind: output, shape index: {0}]
  %s5 = inlined_call_operand.hbm [shape: f32[128,128], index: 5, kind: output, shape index: {1}]
  %6 = xla_tuple %s4, %s5
  %s7 = sld [smem:[#allocation0]]
  $region50: #{tpu_custom_call.1} parent=0
    _
  %s9 = ssub.s32 1, %s7
  %s10 = scalar_select 0, %s9, %s7
  $region1: #{tpu_custom_call.1} parent=0
    #allocation2 [shape = 'u8[32768]{0}', space=vmem, size = 0x8000, scoped, tag = 'input window, operand 0, single buffered']
    #allocation3 [shape = 's32[1]{0}', space=sflag, size = 0x4, scoped, tag = 'scoped memory for tpu_custom_call.1']
    #allocation4 [shape = 's32[1]{0}', space=sflag, size = 0x4, scoped, tag = 'scoped memory for tpu_custom_call.1']
    #allocation5 [shape = 'u8[32768]{0}', space=vmem, size = 0x8000, scoped, tag = 'input window, operand 1, single buffered']
    #allocation6 [shape = 's32[1]{0}', space=sflag, size = 0x4, scoped, tag = 'scoped memory for tpu_custom_call.1']
    #allocation7 [shape = 'u8[32768]{0}', space=vmem, size = 0x8000, scoped, tag = 'input window, operand 2, single buffered']
    #allocation8 [shape = 'u8[32768]{0}', space=vmem, size = 0x8000, scoped, tag = 'input window, operand 3, single buffered']
    #allocation9 [shape = 's32[1]{0}', space=sflag, size = 0x4, scoped, tag = 'scoped memory for tpu_custom_call.1']
    #allocation10 [shape = 'u8[65536]{0}', space=vmem, size = 0x10000, scoped, tag = 'output window, operand 0, single buffered']
    #allocation11 [shape = 'u8[65536]{0}', space=vmem, size = 0x10000, scoped, tag = 'output window, operand 1, single buffered']
    #allocation12 [shape = 's32[1]{0}', space=sflag, size = 0x4, scoped, tag = 'scoped memory for tpu_custom_call.1']
    %11 = vsyncpa [#allocation3], 0
    %12 = vsyncpa [#allocation6], 0
    %13 = vsyncpa [#allocation9], 0
    %14 = vsyncpa [#allocation4], 0
    %15 = vsyncpa [#allocation12], 0
    // Predicated region
    $region2: #{tpu_custom_call.1} parent=1 // pred_check
      _
    $region3: #{tpu_custom_call.1} parent=1 // pred_check_branch
      %17 = sbr.rel (0) target = $region5
    $region4: #{tpu_custom_call.1} parent=1 // pred_region
      %s19 = ssub.s32 1024, 1024
      %20 = vsyncadd [#allocation3], %s19
      %s21 = sshll.u32 [#allocation2], 4
      %s22 = int_to_ptr.vmem [resolvable:$true] %s21
      %27 = dma.hbm_to_vmem [thread:$0]  %s0, 1024, %s22, [#allocation3], 64, 64, 4
    $region5: #{tpu_custom_call.1} parent=1 // pred_fallthru
      _
    // Predicated region
    $region6: #{tpu_custom_call.1} parent=1 // pred_check
      _
    $region7: #{tpu_custom_call.1} parent=1 // pred_check_branch
      %29 = sbr.rel (0) target = $region9
    $region8: #{tpu_custom_call.1} parent=1 // pred_region
      %s31 = ssub.s32 1024, 1024
      %32 = vsyncadd [#allocation6], %s31
      %s33 = sshll.u32 [#allocation5], 4
      %s34 = int_to_ptr.vmem [resolvable:$true] %s33
      %39 = dma.hbm_to_vmem [thread:$0]  %s1, 1024, %s34, [#allocation6], 64, 64, 4
    $region9: #{tpu_custom_call.1} parent=1 // pred_fallthru
      _
    // Predicated region
    $region10: #{tpu_custom_call.1} parent=1 // pred_check
      _
    $region11: #{tpu_custom_call.1} parent=1 // pred_check_branch
      %41 = sbr.rel (0) target = $region13
    $region12: #{tpu_custom_call.1} parent=1 // pred_region
      %s43 = ssub.s32 1024, 1024
      %44 = vsyncadd [#allocation6], %s43
      %s45 = sshll.u32 [#allocation7], 4
      %s46 = int_to_ptr.vmem [resolvable:$true] %s45
      %51 = dma.hbm_to_vmem [thread:$0]  %s2, 1024, %s46, [#allocation6], 64, 64, 4
    $region13: #{tpu_custom_call.1} parent=1 // pred_fallthru
      _
    // Predicated region
    $region14: #{tpu_custom_call.1} parent=1 // pred_check
      _
    $region15: #{tpu_custom_call.1} parent=1 // pred_check_branch
      %53 = sbr.rel (0) target = $region17
    $region16: #{tpu_custom_call.1} parent=1 // pred_region
      %s55 = ssub.s32 1024, 1024
      %56 = vsyncadd [#allocation9], %s55
      %s57 = sshll.u32 [#allocation8], 4
      %s58 = int_to_ptr.vmem [resolvable:$true] %s57
      %63 = dma.hbm_to_vmem [thread:$0]  %s3, 1024, %s58, [#allocation9], 64, 64, 4
    $region17: #{tpu_custom_call.1} parent=1 // pred_fallthru
      _
    // Predicated region
    $region18: #{tpu_custom_call.1} parent=1 // pred_check
      _
    $region19: #{tpu_custom_call.1} parent=1 // pred_check_branch
      %65 = sbr.rel (0) target = $region21
    $region20: #{tpu_custom_call.1} parent=1 // pred_region
      %66 = dma.done [#allocation3], 1024
    $region21: #{tpu_custom_call.1} parent=1 // pred_fallthru
      _
    // Predicated region
    $region22: #{tpu_custom_call.1} parent=1 // pred_check
      _
    $region23: #{tpu_custom_call.1} parent=1 // pred_check_branch
      %68 = sbr.rel (0) target = $region25
    $region24: #{tpu_custom_call.1} parent=1 // pred_region
      %69 = dma.done [#allocation6], 1024
    $region25: #{tpu_custom_call.1} parent=1 // pred_fallthru
      _
    // Predicated region
    $region26: #{tpu_custom_call.1} parent=1 // pred_check
      _
    $region27: #{tpu_custom_call.1} parent=1 // pred_check_branch
      %71 = sbr.rel (0) target = $region29
    $region28: #{tpu_custom_call.1} parent=1 // pred_region
      %72 = dma.done [#allocation6], 1024
    $region29: #{tpu_custom_call.1} parent=1 // pred_fallthru
      _
    // Predicated region
    $region30: #{tpu_custom_call.1} parent=1 // pred_check
      _
    $region31: #{tpu_custom_call.1} parent=1 // pred_check_branch
      %74 = sbr.rel (0) target = $region33
    $region32: #{tpu_custom_call.1} parent=1 // pred_region
      %75 = dma.done [#allocation9], 1024
    $region33: #{tpu_custom_call.1} parent=1 // pred_fallthru
      _
    %v77 = vld [vmem:[#allocation5] sm:$0xf]
    %v78 = vld [vmem:[#allocation5 + $0x4] sm:$0xf]
    %v79 = vld [vmem:[#allocation5 + $0x8] sm:$0xf]
    %v80 = vld [vmem:[#allocation5 + $0xc] sm:$0xf]
    %v81 = vld [vmem:[#allocation5 + $0x10] sm:$0xf]
    %v82 = vld [vmem:[#allocation5 + $0x14] sm:$0xf]
    %v83 = vld [vmem:[#allocation5 + $0x18] sm:$0xf]
    %v84 = vld [vmem:[#allocation5 + $0x1c] sm:$0xf]
    %v85 = vld [vmem:[#allocation5 + $0x20] sm:$0xf]
    %v86 = vld [vmem:[#allocation5 + $0x24] sm:$0xf]
    %v87 = vld [vmem:[#allocation5 + $0x28] sm:$0xf]
    %v88 = vld [vmem:[#allocation5 + $0x2c] sm:$0xf]
    %v89 = vld [vmem:[#allocation5 + $0x30] sm:$0xf]
    %v90 = vld [vmem:[#allocation5 + $0x34] sm:$0xf]
    %v91 = vld [vmem:[#allocation5 + $0x38] sm:$0xf]
    %v92 = vld [vmem:[#allocation5 + $0x3c] sm:$0xf]
    %v93 = vld [vmem:[#allocation2] sm:$0xf]
    %v94 = vld [vmem:[#allocation2 + $0x4] sm:$0xf]
    %v95 = vld [vmem:[#allocation2 + $0x8] sm:$0xf]
    %v96 = vld [vmem:[#allocation2 + $0xc] sm:$0xf]
    %v97 = vld [vmem:[#allocation2 + $0x10] sm:$0xf]
    %v98 = vld [vmem:[#allocation2 + $0x14] sm:$0xf]
    %v99 = vld [vmem:[#allocation2 + $0x18] sm:$0xf]
    %v100 = vld [vmem:[#allocation2 + $0x1c] sm:$0xf]
    %v101 = vld [vmem:[#allocation2 + $0x20] sm:$0xf]
    %v102 = vld [vmem:[#allocation2 + $0x24] sm:$0xf]
    %v103 = vld [vmem:[#allocation2 + $0x28] sm:$0xf]
    %v104 = vld [vmem:[#allocation2 + $0x2c] sm:$0xf]
    %v105 = vld [vmem:[#allocation2 + $0x30] sm:$0xf]
    %v106 = vld [vmem:[#allocation2 + $0x34] sm:$0xf]
    %v107 = vld [vmem:[#allocation2 + $0x38] sm:$0xf]
    %v108 = vld [vmem:[#allocation2 + $0x3c] sm:$0xf]
    %v109 = vld [vmem:[#allocation7] sm:$0xf]
    %v110 = vld [vmem:[#allocation7 + $0x4] sm:$0xf]
    %v111 = vld [vmem:[#allocation7 + $0x8] sm:$0xf]
    %v112 = vld [vmem:[#allocation7 + $0xc] sm:$0xf]
    %v113 = vld [vmem:[#allocation7 + $0x10] sm:$0xf]
    %v114 = vld [vmem:[#allocation7 + $0x14] sm:$0xf]
    %v115 = vld [vmem:[#allocation7 + $0x18] sm:$0xf]
    %v116 = vld [vmem:[#allocation7 + $0x1c] sm:$0xf]
    %v117 = vld [vmem:[#allocation7 + $0x20] sm:$0xf]
    %v118 = vld [vmem:[#allocation7 + $0x24] sm:$0xf]
    %v119 = vld [vmem:[#allocation7 + $0x28] sm:$0xf]
    %v120 = vld [vmem:[#allocation7 + $0x2c] sm:$0xf]
    %v121 = vld [vmem:[#allocation7 + $0x30] sm:$0xf]
    %v122 = vld [vmem:[#allocation7 + $0x34] sm:$0xf]
    %v123 = vld [vmem:[#allocation7 + $0x38] sm:$0xf]
    %v124 = vld [vmem:[#allocation7 + $0x3c] sm:$0xf]
    %v141 = vunpack.c.l.b16 %v93
    %v142 = vunpack.c.l.b16 %v94
    %v143 = vunpack.c.l.b16 %v95
    %v144 = vunpack.c.l.b16 %v96
    %v145 = vunpack.c.l.b16 %v97
    %v146 = vunpack.c.l.b16 %v98
    %v147 = vunpack.c.l.b16 %v99
    %v148 = vunpack.c.l.b16 %v100
    %v149 = vunpack.c.l.b16 %v101
    %v150 = vunpack.c.l.b16 %v102
    %v151 = vunpack.c.l.b16 %v103
    %v152 = vunpack.c.l.b16 %v104
    %v153 = vunpack.c.l.b16 %v105
    %v154 = vunpack.c.l.b16 %v106
    %v155 = vunpack.c.l.b16 %v107
    %v156 = vunpack.c.l.b16 %v108
    %v157 = vpack.c.b16 %v142, %v141
    %v158 = vpack.c.b16 %v144, %v143
    %v159 = vpack.c.b16 %v146, %v145
    %v160 = vpack.c.b16 %v148, %v147
    %v161 = vpack.c.b16 %v150, %v149
    %v162 = vpack.c.b16 %v152, %v151
    %v163 = vpack.c.b16 %v154, %v153
    %v164 = vpack.c.b16 %v156, %v155
    %v189 = vunpack.c.l.b16 %v109
    %v190 = vunpack.c.l.b16 %v110
    %v191 = vunpack.c.l.b16 %v111
    %v192 = vunpack.c.l.b16 %v112
    %v193 = vunpack.c.l.b16 %v113
    %v194 = vunpack.c.l.b16 %v114
    %v195 = vunpack.c.l.b16 %v115
    %v196 = vunpack.c.l.b16 %v116
    %v197 = vunpack.c.l.b16 %v117
    %v198 = vunpack.c.l.b16 %v118
    %v199 = vunpack.c.l.b16 %v119
    %v200 = vunpack.c.l.b16 %v120
    %v201 = vunpack.c.l.b16 %v121
    %v202 = vunpack.c.l.b16 %v122
    %v203 = vunpack.c.l.b16 %v123
    %v204 = vunpack.c.l.b16 %v124
    %v205 = vpack.c.b16 %v190, %v189
    %v206 = vpack.c.b16 %v192, %v191
    %v207 = vpack.c.b16 %v194, %v193
    %v208 = vpack.c.b16 %v196, %v195
    %v209 = vpack.c.b16 %v198, %v197
    %v210 = vpack.c.b16 %v200, %v199
    %v211 = vpack.c.b16 %v202, %v201
    %v212 = vpack.c.b16 %v204, %v203
    %221 = vmatprep.subr.bf16.mxu0 0
    %222 = vmatpush1.bf16.msra.mxu0 %v205
    %223 = vmatprep.subr.bf16.mxu0 0
    %224 = vmatpush1.bf16.msra.mxu0 %v206
    %225 = vmatprep.subr.bf16.mxu0 0
    %226 = vmatpush1.bf16.msra.mxu0 %v207
    %227 = vmatprep.subr.bf16.mxu0 0
    %228 = vmatpush1.bf16.msra.mxu0 %v208
    %229 = vmatprep.subr.bf16.mxu0 0
    %230 = vmatpush1.bf16.msra.mxu0 %v209
    %231 = vmatprep.subr.bf16.mxu0 0
    %232 = vmatpush1.bf16.msra.mxu0 %v210
    %233 = vmatprep.subr.bf16.mxu0 0
    %234 = vmatpush1.bf16.msra.mxu0 %v211
    %235 = vmatprep.subr.bf16.mxu0 0
    %236 = vmatpush1.bf16.msra.mxu0 %v212
    %237 = vmatprep.subr.bf16.mxu0 0
    %238 = vmatpush1.bf16.msra.mxu0 0
    %239 = vmatprep.subr.bf16.mxu0 0
    %240 = vmatpush1.bf16.msra.mxu0 0
    %241 = vmatprep.subr.bf16.mxu0 0
    %242 = vmatpush1.bf16.msra.mxu0 0
    %243 = vmatprep.subr.bf16.mxu0 0
    %244 = vmatpush1.bf16.msra.mxu0 0
    %245 = vmatprep.subr.bf16.mxu0 0
    %246 = vmatpush1.bf16.msra.mxu0 0
    %247 = vmatprep.subr.bf16.mxu0 0
    %248 = vmatpush1.bf16.msra.mxu0 0
    %249 = vmatprep.subr.bf16.mxu0 0
    %250 = vmatpush1.bf16.msra.mxu0 0
    %251 = vmatprep.subr.bf16.mxu0 0
    %252 = vmatpush1.bf16.msra.mxu0 0
    %253 = vmatprep.mubr.bf16.mxu0 0
    %254 = vmatmul.mubr.bf16.gmra.mrb[0].mxu0 %v157
    %v255 = vpop.f32.mrb[0].mxu0
    %v256 = vadd.f32 0.0, %v255
    %v257 = vpop.f32.mrb[0].mxu0
    %v258 = vpop.f32.mrb[0].mxu0
    %v259 = vadd.f32 0.0, %v258
    %v260 = vpop.f32.mrb[0].mxu0
    %261 = vmatprep.mubr.bf16.mxu0 0
    %262 = vmatmul.mubr.bf16.gmra.mrb[0].mxu0 %v158
    %v263 = vpop.f32.mrb[0].mxu0
    %v264 = vadd.f32 0.0, %v263
    %v265 = vpop.f32.mrb[0].mxu0
    %v266 = vpop.f32.mrb[0].mxu0
    %v267 = vadd.f32 0.0, %v266
    %v268 = vpop.f32.mrb[0].mxu0
    %269 = vmatprep.mubr.bf16.mxu0 0
    %270 = vmatmul.mubr.bf16.gmra.mrb[0].mxu0 %v159
    %v271 = vpop.f32.mrb[0].mxu0
    %v272 = vadd.f32 0.0, %v271
    %v273 = vpop.f32.mrb[0].mxu0
    %v274 = vpop.f32.mrb[0].mxu0
    %v275 = vadd.f32 0.0, %v274
    %v276 = vpop.f32.mrb[0].mxu0
    %277 = vmatprep.mubr.bf16.mxu0 0
    %278 = vmatmul.mubr.bf16.gmra.mrb[0].mxu0 %v160
    %v279 = vpop.f32.mrb[0].mxu0
    %v280 = vadd.f32 0.0, %v279
    %v281 = vpop.f32.mrb[0].mxu0
    %v282 = vpop.f32.mrb[0].mxu0
    %v283 = vadd.f32 0.0, %v282
    %v284 = vpop.f32.mrb[0].mxu0
    %285 = vmatprep.mubr.bf16.mxu0 0
    %286 = vmatmul.mubr.bf16.gmra.mrb[0].mxu0 %v161
    %v287 = vpop.f32.mrb[0].mxu0
    %v288 = vadd.f32 0.0, %v287
    %v289 = vpop.f32.mrb[0].mxu0
    %v290 = vpop.f32.mrb[0].mxu0
    %v291 = vadd.f32 0.0, %v290
    %v292 = vpop.f32.mrb[0].mxu0
    %293 = vmatprep.mubr.bf16.mxu0 0
    %294 = vmatmul.mubr.bf16.gmra.mrb[0].mxu0 %v162
    %v295 = vpop.f32.mrb[0].mxu0
    %v296 = vadd.f32 0.0, %v295
    %v297 = vpop.f32.mrb[0].mxu0
    %v298 = vpop.f32.mrb[0].mxu0
    %v299 = vadd.f32 0.0, %v298
    %v300 = vpop.f32.mrb[0].mxu0
    %301 = vmatprep.mubr.bf16.mxu0 0
    %302 = vmatmul.mubr.bf16.gmra.mrb[0].mxu0 %v163
    %v303 = vpop.f32.mrb[0].mxu0
    %v304 = vadd.f32 0.0, %v303
    %v305 = vpop.f32.mrb[0].mxu0
    %v306 = vpop.f32.mrb[0].mxu0
    %v307 = vadd.f32 0.0, %v306
    %v308 = vpop.f32.mrb[0].mxu0
    %309 = vmatprep.mubr.bf16.mxu0 0
    %310 = vmatmul.mubr.bf16.gmra.mrb[0].mxu0 %v164
    %v311 = vpop.f32.mrb[0].mxu0
    %v312 = vadd.f32 0.0, %v311
    %v313 = vpop.f32.mrb[0].mxu0
    %v314 = vpop.f32.mrb[0].mxu0
    %v315 = vadd.f32 0.0, %v314
    %v316 = vpop.f32.mrb[0].mxu0
    %317 = vdwg.mxu0
    %v318 = vpack.c.bf16 %v259, %v256
    %v319 = vpack.c.bf16 %v267, %v264
    %v320 = vpack.c.bf16 %v275, %v272
    %v321 = vpack.c.bf16 %v283, %v280
    %v322 = vpack.c.bf16 %v291, %v288
    %v323 = vpack.c.bf16 %v299, %v296
    %v324 = vpack.c.bf16 %v307, %v304
    %v325 = vpack.c.bf16 %v315, %v312
    %v342 = vunpack.c.l.b16 %v77
    %v343 = vunpack.c.l.b16 %v78
    %v344 = vunpack.c.l.b16 %v79
    %v345 = vunpack.c.l.b16 %v80
    %v346 = vunpack.c.l.b16 %v81
    %v347 = vunpack.c.l.b16 %v82
    %v348 = vunpack.c.l.b16 %v83
    %v349 = vunpack.c.l.b16 %v84
    %v350 = vunpack.c.l.b16 %v85
    %v351 = vunpack.c.l.b16 %v86
    %v352 = vunpack.c.l.b16 %v87
    %v353 = vunpack.c.l.b16 %v88
    %v354 = vunpack.c.l.b16 %v89
    %v355 = vunpack.c.l.b16 %v90
    %v356 = vunpack.c.l.b16 %v91
    %v357 = vunpack.c.l.b16 %v92
    %v358 = vpack.c.b16 %v343, %v342
    %v359 = vpack.c.b16 %v345, %v344
    %v360 = vpack.c.b16 %v347, %v346
    %v361 = vpack.c.b16 %v349, %v348
    %v362 = vpack.c.b16 %v351, %v350
    %v363 = vpack.c.b16 %v353, %v352
    %v364 = vpack.c.b16 %v355, %v354
    %v365 = vpack.c.b16 %v357, %v356
    %374 = vmatprep.subr.bf16.mxu0 0
    %375 = vmatpush1.bf16.msra.mxu0 %v318
    %376 = vmatprep.subr.bf16.mxu0 0
    %377 = vmatpush1.bf16.msra.mxu0 %v319
    %378 = vmatprep.subr.bf16.mxu0 0
    %379 = vmatpush1.bf16.msra.mxu0 %v320
    %380 = vmatprep.subr.bf16.mxu0 0
    %381 = vmatpush1.bf16.msra.mxu0 %v321
    %382 = vmatprep.subr.bf16.mxu0 0
    %383 = vmatpush1.bf16.msra.mxu0 %v322
    %384 = vmatprep.subr.bf16.mxu0 0
    %385 = vmatpush1.bf16.msra.mxu0 %v323
    %386 = vmatprep.subr.bf16.mxu0 0
    %387 = vmatpush1.bf16.msra.mxu0 %v324
    %388 = vmatprep.subr.bf16.mxu0 0
    %389 = vmatpush1.bf16.msra.mxu0 %v325
    %390 = vmatprep.subr.bf16.mxu0 0
    %391 = vmatpush1.bf16.msra.mxu0 0
    %392 = vmatprep.subr.bf16.mxu0 0
    %393 = vmatpush1.bf16.msra.mxu0 0
    %394 = vmatprep.subr.bf16.mxu0 0
    %395 = vmatpush1.bf16.msra.mxu0 0
    %396 = vmatprep.subr.bf16.mxu0 0
    %397 = vmatpush1.bf16.msra.mxu0 0
    %398 = vmatprep.subr.bf16.mxu0 0
    %399 = vmatpush1.bf16.msra.mxu0 0
    %400 = vmatprep.subr.bf16.mxu0 0
    %401 = vmatpush1.bf16.msra.mxu0 0
    %402 = vmatprep.subr.bf16.mxu0 0
    %403 = vmatpush1.bf16.msra.mxu0 0
    %404 = vmatprep.subr.bf16.mxu0 0
    %405 = vmatpush1.bf16.msra.mxu0 0
    %406 = vmatprep.mubr.bf16.mxu0 0
    %407 = vmatmul.mubr.bf16.gmra.mrb[0].mxu0 %v358
    %v408 = vpop.f32.mrb[0].mxu0
    %v409 = vadd.f32 0.0, %v408
    %v410 = vpop.f32.mrb[0].mxu0
    %v411 = vpop.f32.mrb[0].mxu0
    %v412 = vadd.f32 0.0, %v411
    %v413 = vpop.f32.mrb[0].mxu0
    %414 = vmatprep.mubr.bf16.mxu0 0
    %415 = vmatmul.mubr.bf16.gmra.mrb[0].mxu0 %v359
    %v416 = vpop.f32.mrb[0].mxu0
    %v417 = vadd.f32 0.0, %v416
    %v418 = vpop.f32.mrb[0].mxu0
    %v419 = vpop.f32.mrb[0].mxu0
    %v420 = vadd.f32 0.0, %v419
    %v421 = vpop.f32.mrb[0].mxu0
    %422 = vmatprep.mubr.bf16.mxu0 0
    %423 = vmatmul.mubr.bf16.gmra.mrb[0].mxu0 %v360
    %v424 = vpop.f32.mrb[0].mxu0
    %v425 = vadd.f32 0.0, %v424
    %v426 = vpop.f32.mrb[0].mxu0
    %v427 = vpop.f32.mrb[0].mxu0
    %v428 = vadd.f32 0.0, %v427
    %v429 = vpop.f32.mrb[0].mxu0
    %430 = vmatprep.mubr.bf16.mxu0 0
    %431 = vmatmul.mubr.bf16.gmra.mrb[0].mxu0 %v361
    %v432 = vpop.f32.mrb[0].mxu0
    %v433 = vadd.f32 0.0, %v432
    %v434 = vpop.f32.mrb[0].mxu0
    %v435 = vpop.f32.mrb[0].mxu0
    %v436 = vadd.f32 0.0, %v435
    %v437 = vpop.f32.mrb[0].mxu0
    %438 = vmatprep.mubr.bf16.mxu0 0
    %439 = vmatmul.mubr.bf16.gmra.mrb[0].mxu0 %v362
    %v440 = vpop.f32.mrb[0].mxu0
    %v441 = vadd.f32 0.0, %v440
    %v442 = vpop.f32.mrb[0].mxu0
    %v443 = vpop.f32.mrb[0].mxu0
    %v444 = vadd.f32 0.0, %v443
    %v445 = vpop.f32.mrb[0].mxu0
    %446 = vmatprep.mubr.bf16.mxu0 0
    %447 = vmatmul.mubr.bf16.gmra.mrb[0].mxu0 %v363
    %v448 = vpop.f32.mrb[0].mxu0
    %v449 = vadd.f32 0.0, %v448
    %v450 = vpop.f32.mrb[0].mxu0
    %v451 = vpop.f32.mrb[0].mxu0
    %v452 = vadd.f32 0.0, %v451
    %v453 = vpop.f32.mrb[0].mxu0
    %454 = vmatprep.mubr.bf16.mxu0 0
    %455 = vmatmul.mubr.bf16.gmra.mrb[0].mxu0 %v364
    %v456 = vpop.f32.mrb[0].mxu0
    %v457 = vadd.f32 0.0, %v456
    %v458 = vpop.f32.mrb[0].mxu0
    %v459 = vpop.f32.mrb[0].mxu0
    %v460 = vadd.f32 0.0, %v459
    %v461 = vpop.f32.mrb[0].mxu0
    %462 = vmatprep.mubr.bf16.mxu0 0
    %463 = vmatmul.mubr.bf16.gmra.mrb[0].mxu0 %v365
    %v464 = vpop.f32.mrb[0].mxu0
    %v465 = vadd.f32 0.0, %v464
    %v466 = vpop.f32.mrb[0].mxu0
    %v467 = vpop.f32.mrb[0].mxu0
    %v468 = vadd.f32 0.0, %v467
    %v469 = vpop.f32.mrb[0].mxu0
    %470 = vdwg.mxu0
    %v471 = vmax.f32 %v409, 0.0
    %v472 = vmax.f32 %v412, 0.0
    %v473 = vmax.f32 %v417, 0.0
    %v474 = vmax.f32 %v420, 0.0
    %v475 = vmax.f32 %v425, 0.0
    %v476 = vmax.f32 %v428, 0.0
    %v477 = vmax.f32 %v433, 0.0
    %v478 = vmax.f32 %v436, 0.0
    %v479 = vmax.f32 %v441, 0.0
    %v480 = vmax.f32 %v444, 0.0
    %v481 = vmax.f32 %v449, 0.0
    %v482 = vmax.f32 %v452, 0.0
    %v483 = vmax.f32 %v457, 0.0
    %v484 = vmax.f32 %v460, 0.0
    %v485 = vmax.f32 %v465, 0.0
    %v486 = vmax.f32 %v468, 0.0
    %v487 = vpack.c.bf16 %v472, %v471
    %v488 = vpack.c.bf16 %v474, %v473
    %v489 = vpack.c.bf16 %v476, %v475
    %v490 = vpack.c.bf16 %v478, %v477
    %v491 = vpack.c.bf16 %v480, %v479
    %v492 = vpack.c.bf16 %v482, %v481
    %v493 = vpack.c.bf16 %v484, %v483
    %v494 = vpack.c.bf16 %v486, %v485
    %v495 = vld [vmem:[#allocation8] sm:$0xf]
    %v496 = vld [vmem:[#allocation8 + $0x4] sm:$0xf]
    %v497 = vld [vmem:[#allocation8 + $0x8] sm:$0xf]
    %v498 = vld [vmem:[#allocation8 + $0xc] sm:$0xf]
    %v499 = vld [vmem:[#allocation8 + $0x10] sm:$0xf]
    %v500 = vld [vmem:[#allocation8 + $0x14] sm:$0xf]
    %v501 = vld [vmem:[#allocation8 + $0x18] sm:$0xf]
    %v502 = vld [vmem:[#allocation8 + $0x1c] sm:$0xf]
    %v503 = vld [vmem:[#allocation8 + $0x20] sm:$0xf]
    %v504 = vld [vmem:[#allocation8 + $0x24] sm:$0xf]
    %v505 = vld [vmem:[#allocation8 + $0x28] sm:$0xf]
    %v506 = vld [vmem:[#allocation8 + $0x2c] sm:$0xf]
    %v507 = vld [vmem:[#allocation8 + $0x30] sm:$0xf]
    %v508 = vld [vmem:[#allocation8 + $0x34] sm:$0xf]
    %v509 = vld [vmem:[#allocation8 + $0x38] sm:$0xf]
    %v510 = vld [vmem:[#allocation8 + $0x3c] sm:$0xf]
    %v527 = vunpack.c.l.b16 %v495
    %v528 = vunpack.c.l.b16 %v496
    %v529 = vunpack.c.l.b16 %v497
    %v530 = vunpack.c.l.b16 %v498
    %v531 = vunpack.c.l.b16 %v499
    %v532 = vunpack.c.l.b16 %v500
    %v533 = vunpack.c.l.b16 %v501
    %v534 = vunpack.c.l.b16 %v502
    %v535 = vunpack.c.l.b16 %v503
    %v536 = vunpack.c.l.b16 %v504
    %v537 = vunpack.c.l.b16 %v505
    %v538 = vunpack.c.l.b16 %v506
    %v539 = vunpack.c.l.b16 %v507
    %v540 = vunpack.c.l.b16 %v508
    %v541 = vunpack.c.l.b16 %v509
    %v542 = vunpack.c.l.b16 %v510
    %v543 = vpack.c.b16 %v528, %v527
    %v544 = vpack.c.b16 %v530, %v529
    %v545 = vpack.c.b16 %v532, %v531
    %v546 = vpack.c.b16 %v534, %v533
    %v547 = vpack.c.b16 %v536, %v535
    %v548 = vpack.c.b16 %v538, %v537
    %v549 = vpack.c.b16 %v540, %v539
    %v550 = vpack.c.b16 %v542, %v541
    %559 = vmatprep.subr.bf16.mxu0 0
    %560 = vmatpush1.bf16.msra.mxu0 %v543
    %561 = vmatprep.subr.bf16.mxu0 0
    %562 = vmatpush1.bf16.msra.mxu0 %v544
    %563 = vmatprep.subr.bf16.mxu0 0
    %564 = vmatpush1.bf16.msra.mxu0 %v545
    %565 = vmatprep.subr.bf16.mxu0 0
    %566 = vmatpush1.bf16.msra.mxu0 %v546
    %567 = vmatprep.subr.bf16.mxu0 0
    %568 = vmatpush1.bf16.msra.mxu0 %v547
    %569 = vmatprep.subr.bf16.mxu0 0
    %570 = vmatpush1.bf16.msra.mxu0 %v548
    %571 = vmatprep.subr.bf16.mxu0 0
    %572 = vmatpush1.bf16.msra.mxu0 %v549
    %573 = vmatprep.subr.bf16.mxu0 0
    %574 = vmatpush1.bf16.msra.mxu0 %v550
    %575 = vmatprep.subr.bf16.mxu0 0
    %576 = vmatpush1.bf16.msra.mxu0 0
    %577 = vmatprep.subr.bf16.mxu0 0
    %578 = vmatpush1.bf16.msra.mxu0 0
    %579 = vmatprep.subr.bf16.mxu0 0
    %580 = vmatpush1.bf16.msra.mxu0 0
    %581 = vmatprep.subr.bf16.mxu0 0
    %582 = vmatpush1.bf16.msra.mxu0 0
    %583 = vmatprep.subr.bf16.mxu0 0
    %584 = vmatpush1.bf16.msra.mxu0 0
    %585 = vmatprep.subr.bf16.mxu0 0
    %586 = vmatpush1.bf16.msra.mxu0 0
    %587 = vmatprep.subr.bf16.mxu0 0
    %588 = vmatpush1.bf16.msra.mxu0 0
    %589 = vmatprep.subr.bf16.mxu0 0
    %590 = vmatpush1.bf16.msra.mxu0 0
    %591 = vmatprep.mubr.bf16.mxu0 0
    %592 = vmatmul.mubr.bf16.gmra.mrb[0].mxu0 %v487
    %v593 = vpop.f32.mrb[0].mxu0
    %v594 = vadd.f32 0.0, %v593
    %v595 = vpop.f32.mrb[0].mxu0
    %v596 = vpop.f32.mrb[0].mxu0
    %v597 = vadd.f32 0.0, %v596
    %v598 = vpop.f32.mrb[0].mxu0
    %599 = vmatprep.mubr.bf16.mxu0 0
    %600 = vmatmul.mubr.bf16.gmra.mrb[0].mxu0 %v488
    %v601 = vpop.f32.mrb[0].mxu0
    %v602 = vadd.f32 0.0, %v601
    %v603 = vpop.f32.mrb[0].mxu0
    %v604 = vpop.f32.mrb[0].mxu0
    %v605 = vadd.f32 0.0, %v604
    %v606 = vpop.f32.mrb[0].mxu0
    %607 = vmatprep.mubr.bf16.mxu0 0
    %608 = vmatmul.mubr.bf16.gmra.mrb[0].mxu0 %v489
    %v609 = vpop.f32.mrb[0].mxu0
    %v610 = vadd.f32 0.0, %v609
    %v611 = vpop.f32.mrb[0].mxu0
    %v612 = vpop.f32.mrb[0].mxu0
    %v613 = vadd.f32 0.0, %v612
    %v614 = vpop.f32.mrb[0].mxu0
    %615 = vmatprep.mubr.bf16.mxu0 0
    %616 = vmatmul.mubr.bf16.gmra.mrb[0].mxu0 %v490
    %v617 = vpop.f32.mrb[0].mxu0
    %v618 = vadd.f32 0.0, %v617
    %v619 = vpop.f32.mrb[0].mxu0
    %v620 = vpop.f32.mrb[0].mxu0
    %v621 = vadd.f32 0.0, %v620
    %v622 = vpop.f32.mrb[0].mxu0
    %623 = vmatprep.mubr.bf16.mxu0 0
    %624 = vmatmul.mubr.bf16.gmra.mrb[0].mxu0 %v491
    %v625 = vpop.f32.mrb[0].mxu0
    %v626 = vadd.f32 0.0, %v625
    %v627 = vpop.f32.mrb[0].mxu0
    %v628 = vpop.f32.mrb[0].mxu0
    %v629 = vadd.f32 0.0, %v628
    %v630 = vpop.f32.mrb[0].mxu0
    %631 = vmatprep.mubr.bf16.mxu0 0
    %632 = vmatmul.mubr.bf16.gmra.mrb[0].mxu0 %v492
    %v633 = vpop.f32.mrb[0].mxu0
    %v634 = vadd.f32 0.0, %v633
    %v635 = vpop.f32.mrb[0].mxu0
    %v636 = vpop.f32.mrb[0].mxu0
    %v637 = vadd.f32 0.0, %v636
    %v638 = vpop.f32.mrb[0].mxu0
    %639 = vmatprep.mubr.bf16.mxu0 0
    %640 = vmatmul.mubr.bf16.gmra.mrb[0].mxu0 %v493
    %v641 = vpop.f32.mrb[0].mxu0
    %v642 = vadd.f32 0.0, %v641
    %v643 = vpop.f32.mrb[0].mxu0
    %v644 = vpop.f32.mrb[0].mxu0
    %v645 = vadd.f32 0.0, %v644
    %v646 = vpop.f32.mrb[0].mxu0
    %647 = vmatprep.mubr.bf16.mxu0 0
    %648 = vmatmul.mubr.bf16.gmra.mrb[0].mxu0 %v494
    %v649 = vpop.f32.mrb[0].mxu0
    %v650 = vadd.f32 0.0, %v649
    %v651 = vpop.f32.mrb[0].mxu0
    %v652 = vpop.f32.mrb[0].mxu0
    %v653 = vadd.f32 0.0, %v652
    %v654 = vpop.f32.mrb[0].mxu0
    %655 = vdwg.mxu0
    %v656 = vpack.c.bf16 %v597, %v594
    %v657 = vpack.c.bf16 %v605, %v602
    %v658 = vpack.c.bf16 %v613, %v610
    %v659 = vpack.c.bf16 %v621, %v618
    %v660 = vpack.c.bf16 %v629, %v626
    %v661 = vpack.c.bf16 %v637, %v634
    %v662 = vpack.c.bf16 %v645, %v642
    %v663 = vpack.c.bf16 %v653, %v650
    %664 = vmatprep.subr.bf16.mxu0 0
    %665 = vmatpush1.bf16.msra.mxu0 %v656
    %666 = vmatprep.subr.bf16.mxu0 0
    %667 = vmatpush1.bf16.msra.mxu0 %v657
    %668 = vmatprep.subr.bf16.mxu0 0
    %669 = vmatpush1.bf16.msra.mxu0 %v658
    %670 = vmatprep.subr.bf16.mxu0 0
    %671 = vmatpush1.bf16.msra.mxu0 %v659
    %672 = vmatprep.subr.bf16.mxu0 0
    %673 = vmatpush1.bf16.msra.mxu0 %v660
    %674 = vmatprep.subr.bf16.mxu0 0
    %675 = vmatpush1.bf16.msra.mxu0 %v661
    %676 = vmatprep.subr.bf16.mxu0 0
    %677 = vmatpush1.bf16.msra.mxu0 %v662
    %678 = vmatprep.subr.bf16.mxu0 0
    %679 = vmatpush1.bf16.msra.mxu0 %v663
    %680 = vmatprep.subr.bf16.mxu0 0
    %681 = vmatpush1.bf16.msra.mxu0 0
    %682 = vmatprep.subr.bf16.mxu0 0
    %683 = vmatpush1.bf16.msra.mxu0 0
    %684 = vmatprep.subr.bf16.mxu0 0
    %685 = vmatpush1.bf16.msra.mxu0 0
    %686 = vmatprep.subr.bf16.mxu0 0
    %687 = vmatpush1.bf16.msra.mxu0 0
    %688 = vmatprep.subr.bf16.mxu0 0
    %689 = vmatpush1.bf16.msra.mxu0 0
    %690 = vmatprep.subr.bf16.mxu0 0
    %691 = vmatpush1.bf16.msra.mxu0 0
    %692 = vmatprep.subr.bf16.mxu0 0
    %693 = vmatpush1.bf16.msra.mxu0 0
    %694 = vmatprep.subr.bf16.mxu0 0
    %695 = vmatpush1.bf16.msra.mxu0 0
    %696 = vmatprep.mubr.bf16.mxu0 0
    %697 = vmatmul.mubr.bf16.gmra.mrb[0].mxu0 %v358
    %v698 = vpop.f32.mrb[0].mxu0
    %v699 = vadd.f32 0.0, %v698
    %v700 = vpop.f32.mrb[0].mxu0
    %v701 = vpop.f32.mrb[0].mxu0
    %v702 = vadd.f32 0.0, %v701
    %v703 = vpop.f32.mrb[0].mxu0
    %704 = vmatprep.mubr.bf16.mxu0 0
    %705 = vmatmul.mubr.bf16.gmra.mrb[0].mxu0 %v359
    %v706 = vpop.f32.mrb[0].mxu0
    %v707 = vadd.f32 0.0, %v706
    %v708 = vpop.f32.mrb[0].mxu0
    %v709 = vpop.f32.mrb[0].mxu0
    %v710 = vadd.f32 0.0, %v709
    %v711 = vpop.f32.mrb[0].mxu0
    %712 = vmatprep.mubr.bf16.mxu0 0
    %713 = vmatmul.mubr.bf16.gmra.mrb[0].mxu0 %v360
    %v714 = vpop.f32.mrb[0].mxu0
    %v715 = vadd.f32 0.0, %v714
    %v716 = vpop.f32.mrb[0].mxu0
    %v717 = vpop.f32.mrb[0].mxu0
    %v718 = vadd.f32 0.0, %v717
    %v719 = vpop.f32.mrb[0].mxu0
    %720 = vmatprep.mubr.bf16.mxu0 0
    %721 = vmatmul.mubr.bf16.gmra.mrb[0].mxu0 %v361
    %v722 = vpop.f32.mrb[0].mxu0
    %v723 = vadd.f32 0.0, %v722
    %v724 = vpop.f32.mrb[0].mxu0
    %v725 = vpop.f32.mrb[0].mxu0
    %v726 = vadd.f32 0.0, %v725
    %v727 = vpop.f32.mrb[0].mxu0
    %728 = vmatprep.mubr.bf16.mxu0 0
    %729 = vmatmul.mubr.bf16.gmra.mrb[0].mxu0 %v362
    %v730 = vpop.f32.mrb[0].mxu0
    %v731 = vadd.f32 0.0, %v730
    %v732 = vpop.f32.mrb[0].mxu0
    %v733 = vpop.f32.mrb[0].mxu0
    %v734 = vadd.f32 0.0, %v733
    %v735 = vpop.f32.mrb[0].mxu0
    %736 = vmatprep.mubr.bf16.mxu0 0
    %737 = vmatmul.mubr.bf16.gmra.mrb[0].mxu0 %v363
    %v738 = vpop.f32.mrb[0].mxu0
    %v739 = vadd.f32 0.0, %v738
    %v740 = vpop.f32.mrb[0].mxu0
    %v741 = vpop.f32.mrb[0].mxu0
    %v742 = vadd.f32 0.0, %v741
    %v743 = vpop.f32.mrb[0].mxu0
    %744 = vmatprep.mubr.bf16.mxu0 0
    %745 = vmatmul.mubr.bf16.gmra.mrb[0].mxu0 %v364
    %v746 = vpop.f32.mrb[0].mxu0
    %v747 = vadd.f32 0.0, %v746
    %v748 = vpop.f32.mrb[0].mxu0
    %v749 = vpop.f32.mrb[0].mxu0
    %v750 = vadd.f32 0.0, %v749
    %v751 = vpop.f32.mrb[0].mxu0
    %752 = vmatprep.mubr.bf16.mxu0 0
    %753 = vmatmul.mubr.bf16.gmra.mrb[0].mxu0 %v365
    %v754 = vpop.f32.mrb[0].mxu0
    %v755 = vadd.f32 0.0, %v754
    %v756 = vpop.f32.mrb[0].mxu0
    %v757 = vpop.f32.mrb[0].mxu0
    %v758 = vadd.f32 0.0, %v757
    %v759 = vpop.f32.mrb[0].mxu0
    %760 = vdwg.mxu0
    %761 = vst [vmem:[#allocation11] sm:$0xff] %v699
    %762 = vst [vmem:[#allocation11 + $0x8] sm:$0xff] %v702
    %763 = vst [vmem:[#allocation11 + $0x10] sm:$0xff] %v707
    %764 = vst [vmem:[#allocation11 + $0x18] sm:$0xff] %v710
    %765 = vst [vmem:[#allocation11 + $0x20] sm:$0xff] %v715
    %766 = vst [vmem:[#allocation11 + $0x28] sm:$0xff] %v718
    %767 = vst [vmem:[#allocation11 + $0x30] sm:$0xff] %v723
    %768 = vst [vmem:[#allocation11 + $0x38] sm:$0xff] %v726
    %769 = vst [vmem:[#allocation11 + $0x40] sm:$0xff] %v731
    %770 = vst [vmem:[#allocation11 + $0x48] sm:$0xff] %v734
    %771 = vst [vmem:[#allocation11 + $0x50] sm:$0xff] %v739
    %772 = vst [vmem:[#allocation11 + $0x58] sm:$0xff] %v742
    %773 = vst [vmem:[#allocation11 + $0x60] sm:$0xff] %v747
    %774 = vst [vmem:[#allocation11 + $0x68] sm:$0xff] %v750
    %775 = vst [vmem:[#allocation11 + $0x70] sm:$0xff] %v755
    %776 = vst [vmem:[#allocation11 + $0x78] sm:$0xff] %v758
    %v777 = vlaneseq
    %v778 = vand.u32 %v777, 127
    %vm779 = vcmp.lt.s32.totalorder %v778, 16
    %v780 = vsel %vm779, %v699, 0.0
    %v781 = vsel %vm779, %v702, 0.0
    %v782 = vsel %vm779, %v707, 0.0
    %v783 = vsel %vm779, %v710, 0.0
    %v784 = vsel %vm779, %v715, 0.0
    %v785 = vsel %vm779, %v718, 0.0
    %v786 = vsel %vm779, %v723, 0.0
    %v787 = vsel %vm779, %v726, 0.0
    %v788 = vsel %vm779, %v731, 0.0
    %v789 = vsel %vm779, %v734, 0.0
    %v790 = vsel %vm779, %v739, 0.0
    %v791 = vsel %vm779, %v742, 0.0
    %v792 = vsel %vm779, %v747, 0.0
    %v793 = vsel %vm779, %v750, 0.0
    %v794 = vsel %vm779, %v755, 0.0
    %v795 = vsel %vm779, %v758, 0.0
    %v796 = vpack.c.bf16 %v781, %v780
    %v797 = vpack.c.bf16 %v783, %v782
    %v798 = vpack.c.bf16 %v785, %v784
    %v799 = vpack.c.bf16 %v787, %v786
    %v800 = vpack.c.bf16 %v789, %v788
    %v801 = vpack.c.bf16 %v791, %v790
    %v802 = vpack.c.bf16 %v793, %v792
    %v803 = vpack.c.bf16 %v795, %v794
    %804 = vmatprep.subr.bf16.mxu0 0
    %805 = vmatpush1.bf16.xpose.msra.mxu0 %v796
    %806 = vmatprep.subr.bf16.mxu0 0
    %807 = vmatpush1.bf16.xpose.msra.mxu0 %v797
    %808 = vmatprep.subr.bf16.mxu0 0
    %809 = vmatpush1.bf16.xpose.msra.mxu0 %v798
    %810 = vmatprep.subr.bf16.mxu0 0
    %811 = vmatpush1.bf16.xpose.msra.mxu0 %v799
    %812 = vmatprep.subr.bf16.mxu0 0
    %813 = vmatpush1.bf16.xpose.msra.mxu0 %v800
    %814 = vmatprep.subr.bf16.mxu0 0
    %815 = vmatpush1.bf16.xpose.msra.mxu0 %v801
    %816 = vmatprep.subr.bf16.mxu0 0
    %817 = vmatpush1.bf16.xpose.msra.mxu0 %v802
    %818 = vmatprep.subr.bf16.mxu0 0
    %819 = vmatpush1.bf16.xpose.msra.mxu0 %v803
    %820 = vmatprep.subr.bf16.mxu0 0
    %821 = vmatpush1.bf16.xpose.msra.mxu0 0
    %822 = vmatprep.subr.bf16.mxu0 0
    %823 = vmatpush1.bf16.xpose.msra.mxu0 0
    %824 = vmatprep.subr.bf16.mxu0 0
    %825 = vmatpush1.bf16.xpose.msra.mxu0 0
    %826 = vmatprep.subr.bf16.mxu0 0
    %827 = vmatpush1.bf16.xpose.msra.mxu0 0
    %828 = vmatprep.subr.bf16.mxu0 0
    %829 = vmatpush1.bf16.xpose.msra.mxu0 0
    %830 = vmatprep.subr.bf16.mxu0 0
    %831 = vmatpush1.bf16.xpose.msra.mxu0 0
    %832 = vmatprep.subr.bf16.mxu0 0
    %833 = vmatpush1.bf16.xpose.msra.mxu0 0
    %834 = vmatprep.subr.bf16.mxu0 0
    %835 = vmatpush1.bf16.xpose.msra.mxu0 0
    %836 = vmatprep.mubr.bf16.mxu0 0
    %837 = vmatmul.mubr.bf16.gmra.mrb[0].mxu0 %v796
    %v838 = vpop.f32.mrb[0].mxu0
    %v839 = vadd.f32 0.0, %v838
    %v840 = vpop.f32.mrb[0].mxu0
    %v841 = vpop.f32.mrb[0].mxu0
    %v842 = vadd.f32 0.0, %v841
    %v843 = vpop.f32.mrb[0].mxu0
    %844 = vmatprep.mubr.bf16.mxu0 0
    %845 = vmatmul.mubr.bf16.gmra.mrb[0].mxu0 %v797
    %v846 = vpop.f32.mrb[0].mxu0
    %v847 = vadd.f32 0.0, %v846
    %v848 = vpop.f32.mrb[0].mxu0
    %v849 = vpop.f32.mrb[0].mxu0
    %v850 = vadd.f32 0.0, %v849
    %v851 = vpop.f32.mrb[0].mxu0
    %852 = vmatprep.mubr.bf16.mxu0 0
    %853 = vmatmul.mubr.bf16.gmra.mrb[0].mxu0 %v798
    %v854 = vpop.f32.mrb[0].mxu0
    %v855 = vadd.f32 0.0, %v854
    %v856 = vpop.f32.mrb[0].mxu0
    %v857 = vpop.f32.mrb[0].mxu0
    %v858 = vadd.f32 0.0, %v857
    %v859 = vpop.f32.mrb[0].mxu0
    %860 = vmatprep.mubr.bf16.mxu0 0
    %861 = vmatmul.mubr.bf16.gmra.mrb[0].mxu0 %v799
    %v862 = vpop.f32.mrb[0].mxu0
    %v863 = vadd.f32 0.0, %v862
    %v864 = vpop.f32.mrb[0].mxu0
    %v865 = vpop.f32.mrb[0].mxu0
    %v866 = vadd.f32 0.0, %v865
    %v867 = vpop.f32.mrb[0].mxu0
    %868 = vmatprep.mubr.bf16.mxu0 0
    %869 = vmatmul.mubr.bf16.gmra.mrb[0].mxu0 %v800
    %v870 = vpop.f32.mrb[0].mxu0
    %v871 = vadd.f32 0.0, %v870
    %v872 = vpop.f32.mrb[0].mxu0
    %v873 = vpop.f32.mrb[0].mxu0
    %v874 = vadd.f32 0.0, %v873
    %v875 = vpop.f32.mrb[0].mxu0
    %876 = vmatprep.mubr.bf16.mxu0 0
    %877 = vmatmul.mubr.bf16.gmra.mrb[0].mxu0 %v801
    %v878 = vpop.f32.mrb[0].mxu0
    %v879 = vadd.f32 0.0, %v878
    %v880 = vpop.f32.mrb[0].mxu0
    %v881 = vpop.f32.mrb[0].mxu0
    %v882 = vadd.f32 0.0, %v881
    %v883 = vpop.f32.mrb[0].mxu0
    %884 = vmatprep.mubr.bf16.mxu0 0
    %885 = vmatmul.mubr.bf16.gmra.mrb[0].mxu0 %v802
    %v886 = vpop.f32.mrb[0].mxu0
    %v887 = vadd.f32 0.0, %v886
    %v888 = vpop.f32.mrb[0].mxu0
    %v889 = vpop.f32.mrb[0].mxu0
    %v890 = vadd.f32 0.0, %v889
    %v891 = vpop.f32.mrb[0].mxu0
    %892 = vmatprep.mubr.bf16.mxu0 0
    %893 = vmatmul.mubr.bf16.gmra.mrb[0].mxu0 %v803
    %v894 = vpop.f32.mrb[0].mxu0
    %v895 = vadd.f32 0.0, %v894
    %v896 = vpop.f32.mrb[0].mxu0
    %v897 = vpop.f32.mrb[0].mxu0
    %v898 = vadd.f32 0.0, %v897
    %v899 = vpop.f32.mrb[0].mxu0
    %900 = vdwg.mxu0
    %901 = vst [vmem:[#allocation10] sm:$0xff] %v839
    %902 = vst [vmem:[#allocation10 + $0x8] sm:$0xff] %v842
    %903 = vst [vmem:[#allocation10 + $0x10] sm:$0xff] %v847
    %904 = vst [vmem:[#allocation10 + $0x18] sm:$0xff] %v850
    %905 = vst [vmem:[#allocation10 + $0x20] sm:$0xff] %v855
    %906 = vst [vmem:[#allocation10 + $0x28] sm:$0xff] %v858
    %907 = vst [vmem:[#allocation10 + $0x30] sm:$0xff] %v863
    %908 = vst [vmem:[#allocation10 + $0x38] sm:$0xff] %v866
    %909 = vst [vmem:[#allocation10 + $0x40] sm:$0xff] %v871
    %910 = vst [vmem:[#allocation10 + $0x48] sm:$0xff] %v874
    %911 = vst [vmem:[#allocation10 + $0x50] sm:$0xff] %v879
    %912 = vst [vmem:[#allocation10 + $0x58] sm:$0xff] %v882
    %913 = vst [vmem:[#allocation10 + $0x60] sm:$0xff] %v887
    %914 = vst [vmem:[#allocation10 + $0x68] sm:$0xff] %v890
    %915 = vst [vmem:[#allocation10 + $0x70] sm:$0xff] %v895
    %916 = vst [vmem:[#allocation10 + $0x78] sm:$0xff] %v898
    // Predicated region
    $region34: #{tpu_custom_call.1} parent=1 // pred_check
      _
    $region35: #{tpu_custom_call.1} parent=1 // pred_check_branch
      %918 = sbr.rel (0) target = $region37
    $region36: #{tpu_custom_call.1} parent=1 // pred_region
      %s920 = ssub.s32 2048, 2048
      %921 = vsyncadd [#allocation4], %s920
      %s922 = sshll.u32 [#allocation10], 4
      %s923 = int_to_ptr.vmem [resolvable:$true] %s922
      %928 = dma.vmem_to_hbm [thread:$0]  %s923, 2048, %s4, [#allocation4], 128, 128, 8
    $region37: #{tpu_custom_call.1} parent=1 // pred_fallthru
      _
    // Predicated region
    $region38: #{tpu_custom_call.1} parent=1 // pred_check
      _
    $region39: #{tpu_custom_call.1} parent=1 // pred_check_branch
      %930 = sbr.rel (0) target = $region41
    $region40: #{tpu_custom_call.1} parent=1 // pred_region
      %s932 = ssub.s32 2048, 2048
      %933 = vsyncadd [#allocation12], %s932
      %s934 = sshll.u32 [#allocation11], 4
      %s935 = int_to_ptr.vmem [resolvable:$true] %s934
      %940 = dma.vmem_to_hbm [thread:$0]  %s935, 2048, %s5, [#allocation12], 128, 128, 8
    $region41: #{tpu_custom_call.1} parent=1 // pred_fallthru
      _
    // Predicated region
    $region42: #{tpu_custom_call.1} parent=1 // pred_check
      _
    $region43: #{tpu_custom_call.1} parent=1 // pred_check_branch
      %942 = sbr.rel (0) target = $region45
    $region44: #{tpu_custom_call.1} parent=1 // pred_region
      %943 = dma.done [#allocation4], 2048
    $region45: #{tpu_custom_call.1} parent=1 // pred_fallthru
      _
    // Predicated region
    $region46: #{tpu_custom_call.1} parent=1 // pred_check
      _
    $region47: #{tpu_custom_call.1} parent=1 // pred_check_branch
      %945 = sbr.rel (0) target = $region49
    $region48: #{tpu_custom_call.1} parent=1 // pred_region
      %946 = dma.done [#allocation12], 2048
    $region49: #{tpu_custom_call.1} parent=1 // pred_fallthru
      _
    %947 = vsyncpa [#allocation3], 1
    %948 = vsyncpa [#allocation6], 1
    %949 = vsyncpa [#allocation9], 1
    %950 = vsyncpa [#allocation4], 1
    %951 = vsyncpa [#allocation12], 1

</llo_original>
